<compile_context>
chip_gen: v5e
topology: v5e:2x2
jax: 0.10.0
libtpu: 0.0.40
codegen_flags: <defaults>
</compile_context>

<pallas_src>
import math

import jax
import jax.numpy as jnp
from jax.experimental import pallas as pl
from jax.experimental.pallas import tpu as pltpu

_LANE = 128
_MIB = 1024 * 1024


def _scaler_kernel(x_ref, scale_ref, shift_ref, o_ref):
    # x_ref: (block_rows, block_cols); scale/shift: (1, block_cols) f32,
    # broadcast over rows.  Compute in f32, cast only on the store.
    x = x_ref[...].astype(jnp.float32)
    o_ref[...] = (x * scale_ref[...] + shift_ref[...]).astype(o_ref.dtype)


def _sublane_multiple(dtype) -> int:
    # Packed sublane tile: 8 rows for 4-byte, 16 for 2-byte, 32 for 1-byte.
    return max(8, 32 // jnp.dtype(dtype).itemsize)


def _tpu_vmem_capacity_bytes() -> int:
    try:
        info = pltpu.get_tpu_info()
        cap = getattr(info, "vmem_capacity_bytes", None)
        if cap:
            return int(cap)
    except Exception:
        pass
    return 128 * _MIB  # v5e/v6e-style default


def scaler_forward(x, m, s, *, block_rows=None, donate_x=False):
    """out = (x - m) / s.  m/s must broadcast against x over non-batch dims."""
    orig_shape = x.shape
    B = int(orig_shape[0])
    inner = int(math.prod(orig_shape[1:]))
    itemsize = jnp.dtype(x.dtype).itemsize
    sublane = _sublane_multiple(x.dtype)

    # ---- fold parameters once (tiny buffers); keep them in f32 ----
    inv_s = 1.0 / s.astype(jnp.float32)
    scale = jnp.broadcast_to(inv_s, (1,) + tuple(orig_shape[1:])).reshape(1, inner)
    shift = jnp.broadcast_to(-m.astype(jnp.float32) * inv_s,
                             (1,) + tuple(orig_shape[1:])).reshape(1, inner)

    # ---- flatten to (B, inner); pad lanes to a multiple of 128 ----
    x2d = x.reshape(B, inner)
    inner_p = -(-inner // _LANE) * _LANE
    if inner_p != inner:
        pad = inner_p - inner
        x2d = jnp.pad(x2d, ((0, 0), (0, pad)))
        scale = jnp.pad(scale, ((0, 0), (0, pad)), constant_values=1.0)
        shift = jnp.pad(shift, ((0, 0), (0, pad)), constant_values=0.0)

    # ---- block sizing by byte budget, per-generation VMEM aware ----
    vmem_cap = _tpu_vmem_capacity_bytes()
    small_vmem = vmem_cap <= 64 * _MIB          # v7x-like: 64 MiB VMEM, 2 TCs
    dual_tc = small_vmem
    target_block_bytes = (3 if small_vmem else 6) * _MIB

    # Column tiling only if even `sublane` rows of the full lane extent would
    # blow the block budget (very large inner).
    block_cols = inner_p
    if block_cols * itemsize * sublane > target_block_bytes:
        block_cols = max(
            _LANE,
            (target_block_bytes // (sublane * itemsize)) // _LANE * _LANE)
    col_bytes = block_cols * itemsize

    if block_rows is None:
        max_rows = max(sublane, target_block_bytes // col_bytes)
    else:
        max_rows = max(1, int(block_rows))
    if max_rows >= B:
        block_rows = B                           # full row extent: always legal
    else:
        block_rows = max(sublane, (max_rows // sublane) * sublane)

    n_row = -(-B // block_rows)
    n_col = -(-inner_p // block_cols)
    total_bytes = B * inner_p * itemsize

    # Dual-TC chips: ensure >= 4 grid steps (>= 2 blocks per core, so the
    # pipeline still has something to prefetch), but only for non-trivial data.
    if (dual_tc and total_bytes > 4 * _MIB and n_row * n_col < 4
            and B >= 4 * sublane):
        block_rows = max(sublane, (B // 4 // sublane) * sublane)
        n_row = -(-B // block_rows)

    # Scoped-VMEM budget: 2 buffers x (x block + out block) + f32 scale/shift.
    block_bytes = block_rows * block_cols * itemsize
    footprint = 4 * block_bytes + 4 * block_cols * 4 + 64 * 1024
    vmem_limit = int(min(vmem_cap * 3 // 4,
                         max(32 * _MIB, footprint + 8 * _MIB)))

    extra = {}
    if donate_x:
        extra["input_output_aliases"] = {0: 0}

    out2d = pl.pallas_call(
        _scaler_kernel,
        out_shape=jax.ShapeDtypeStruct((B, inner_p), x.dtype),
        grid=(n_row, n_col),
        in_specs=[
            pl.BlockSpec((block_rows, block_cols), lambda i, j: (i, j)),
            pl.BlockSpec((1, block_cols), lambda i, j: (0, j)),
            pl.BlockSpec((1, block_cols), lambda i, j: (0, j)),
        ],
        out_specs=pl.BlockSpec((block_rows, block_cols), lambda i, j: (i, j)),
        compiler_params=pltpu.CompilerParams(
            dimension_semantics=("parallel", "parallel"),
            vmem_limit_bytes=vmem_limit,
        ),
        **extra,
    )(x2d, scale, shift)

    if inner_p != inner:
        out2d = out2d[:, :inner]
    return out2d.reshape(orig_shape)


def reference(x, m, s):
    """Pure-JAX mirror of the PyTorch forward."""
    return (x - m) / s


if __name__ == "__main__":
    key = jax.random.PRNGKey(0)
    kx, km, ks, kx2, km2, ks2 = jax.random.split(key, 6)

    # Case 1: canonical NCW input with (1, features, 1) buffers; inner = 128.
    B, C, W = 16, 8, 16
    x = jax.random.normal(kx, (B, C, W), jnp.float32)
    m = 0.5 * jax.random.normal(km, (1, C, 1), jnp.float32)
    s = 1.0 + 0.25 * jnp.abs(jax.random.normal(ks, (1, C, 1), jnp.float32))
    out = jax.block_until_ready(scaler_forward(x, m, s))
    ref = reference(x, m, s)
    assert out.shape == x.shape, out.shape
    err = float(jnp.max(jnp.abs(out - ref)))
    assert jnp.allclose(out, ref, atol=1e-5, rtol=1e-5), err

    # Case 2: inner not a multiple of 128 (lane-padding path) and batch not a
    # multiple of 8 (full-extent row block path).
    B2, C2, W2 = 6, 5, 13
    x2 = jax.random.normal(kx2, (B2, C2, W2), jnp.float32)
    m2 = 0.5 * jax.random.normal(km2, (1, C2, 1), jnp.float32)
    s2 = 1.0 + 0.25 * jnp.abs(jax.random.normal(ks2, (1, C2, 1), jnp.float32))
    out2 = jax.block_until_ready(scaler_forward(x2, m2, s2))
    ref2 = reference(x2, m2, s2)
    assert out2.shape == x2.shape, out2.shape
    err2 = float(jnp.max(jnp.abs(out2 - ref2)))
    assert jnp.allclose(out2, ref2, atol=1e-5, rtol=1e-5), err2

    print("KERNEL_OK")
</pallas_src>

<mosaic_0001>
module attributes {stable_mosaic.version = 11 : i64} {
  func.func @_scaler_kernel(%arg0: i32, %arg1: i32, %arg2: memref<16x128xf32, #tpu.memory_space<vmem>>, %arg3: memref<1x128xf32, #tpu.memory_space<vmem>>, %arg4: memref<1x128xf32, #tpu.memory_space<vmem>>, %arg5: memref<16x128xf32, #tpu.memory_space<vmem>>) attributes {dimension_semantics = [#tpu.dimension_semantics<parallel>, #tpu.dimension_semantics<parallel>], iteration_bounds = array<i64: 1, 1>, scalar_prefetch = 0 : i64, scratch_operands = 0 : i64, tpu.core_type = #tpu.core_type<tc>, window_params = [{transform_indices = @transform_0, window_bounds = array<i64: 16, 128>}, {transform_indices = @transform_1, window_bounds = array<i64: 1, 128>}, {transform_indices = @transform_2, window_bounds = array<i64: 1, 128>}, {transform_indices = @transform_3, window_bounds = array<i64: 16, 128>}]} {
    %c0 = arith.constant 0 : index
    %c0_0 = arith.constant 0 : index
    %0 = vector.load %arg2[%c0, %c0_0] : memref<16x128xf32, #tpu.memory_space<vmem>>, vector<16x128xf32>
    %c0_1 = arith.constant 0 : index
    %c0_2 = arith.constant 0 : index
    %1 = vector.load %arg3[%c0_1, %c0_2] : memref<1x128xf32, #tpu.memory_space<vmem>>, vector<1x128xf32>
    %2 = vector.broadcast %1 : vector<1x128xf32> to vector<16x128xf32>
    %3 = arith.mulf %0, %2 : vector<16x128xf32>
    %c0_3 = arith.constant 0 : index
    %c0_4 = arith.constant 0 : index
    %4 = vector.load %arg4[%c0_3, %c0_4] : memref<1x128xf32, #tpu.memory_space<vmem>>, vector<1x128xf32>
    %5 = vector.broadcast %4 : vector<1x128xf32> to vector<16x128xf32>
    %6 = arith.addf %3, %5 : vector<16x128xf32>
    %c0_5 = arith.constant 0 : index
    %c0_6 = arith.constant 0 : index
    %7 = vector.load %arg5[%c0_5, %c0_6] : memref<16x128xf32, #tpu.memory_space<vmem>>, vector<16x128xf32>
    tpu.vector_store %arg5[%c0_5, %c0_6], %6 {strides = array<i32>} : memref<16x128xf32, #tpu.memory_space<vmem>>, vector<16x128xf32>,
    return
  }
  func.func @transform_0(%arg0: i32, %arg1: i32) -> (i32, i32) {
    %c0_i32 = arith.constant 0 : i32
    return %arg0, %arg1 : i32, i32
  }
  func.func @transform_1(%arg0: i32, %arg1: i32) -> (i32, i32) {
    %c0_i32 = arith.constant 0 : i32
    %c0_i32_0 = arith.constant 0 : i32
    return %c0_i32, %arg1 : i32, i32
  }
  func.func @transform_2(%arg0: i32, %arg1: i32) -> (i32, i32) {
    %c0_i32 = arith.constant 0 : i32
    %c0_i32_0 = arith.constant 0 : i32
    return %c0_i32, %arg1 : i32, i32
  }
  func.func @transform_3(%arg0: i32, %arg1: i32) -> (i32, i32) {
    %c0_i32 = arith.constant 0 : i32
    return %arg0, %arg1 : i32, i32
  }
}

</mosaic_0001>

<llo_original>
// kernel: tpu_custom_call.1
$region0: #{tpu_custom_call.1}
  #allocation0 [shape = 'u32[]', space=smem, size = 0x4, offset = 0x4, fixed_abs, tag = 'smem constant byte address 0x4 - core index']
  #allocation1 [shape = 'u32[72,128]{1,0:T(1,128)}', space=vmem, size = 0x9000, scoped, tag = 'internal scratch']
  %s0 = inlined_call_operand.hbm [shape: f32[16,128], index: 0, kind: input, shape index: {}]
  %s1 = inlined_call_operand.hbm [shape: f32[1,128], index: 1, kind: input, shape index: {}]
  %s2 = inlined_call_operand.vmem [shape: f32[1,128], index: 2, kind: input, shape index: {}]
  %s3 = inlined_call_operand.hbm [shape: f32[16,128], index: 3, kind: output, shape index: {}]
  %s4 = sld [smem:[#allocation0]]
  $region30: #{tpu_custom_call.1} parent=0
    _
  %s6 = ssub.s32 1, %s4
  %s7 = scalar_select 0, %s6, %s4
  $region1: #{tpu_custom_call.1} parent=0
    #allocation2 [shape = 'u8[8192]{0}', space=vmem, size = 0x2000, scoped, tag = 'input window, operand 0, single buffered']
    #allocation3 [shape = 's32[1]{0}', space=sflag, size = 0x4, scoped, tag = 'scoped memory for tpu_custom_call.1']
    #allocation4 [shape = 's32[1]{0}', space=sflag, size = 0x4, scoped, tag = 'scoped memory for tpu_custom_call.1']
    #allocation5 [shape = 'u8[512]{0}', space=vmem, size = 0x400, scoped, tag = 'input window, operand 1, single buffered']
    #allocation6 [shape = 's32[1]{0}', space=sflag, size = 0x4, scoped, tag = 'scoped memory for tpu_custom_call.1']
    #allocation7 [shape = 'u8[8192]{0}', space=vmem, size = 0x2000, scoped, tag = 'output window, operand 0, single buffered']
    %8 = vsyncpa [#allocation3], 0
    %9 = vsyncpa [#allocation6], 0
    %10 = vsyncpa [#allocation4], 0
    // Predicated region
    $region2: #{tpu_custom_call.1} parent=1 // pred_check
      _
    $region3: #{tpu_custom_call.1} parent=1 // pred_check_branch
      %12 = sbr.rel (0) target = $region5
    $region4: #{tpu_custom_call.1} parent=1 // pred_region
      %14 = vsyncadd [#allocation3], 0
      %s15 = sshll.u32 %s0, 4
      %s16 = int_to_ptr.hbm [resolvable:$true] %s15
      %s17 = sshll.u32 [#allocation2], 4
      %s18 = int_to_ptr.vmem [resolvable:$true] %s17
      %23 = dma.hbm_to_vmem [thread:$0]  %s16, 256, %s18, [#allocation3], 128, 128, 8
    $region5: #{tpu_custom_call.1} parent=1 // pred_fallthru
      _
    // Predicated region
    $region6: #{tpu_custom_call.1} parent=1 // pred_check
      _
    $region7: #{tpu_custom_call.1} parent=1 // pred_check_branch
      %25 = sbr.rel (0) target = $region9
    $region8: #{tpu_custom_call.1} parent=1 // pred_region
      %27 = vsyncadd [#allocation6], 0
      %s29 = sshll.u32 %s1, 4
      %s30 = int_to_ptr.hbm [resolvable:$true] %s29
      %s31 = sshll.u32 [#allocation5], 4
      %s32 = int_to_ptr.vmem [resolvable:$true] %s31
      %34 = dma.hbm_to_vmem [thread:$0]  %s30, 16, %s32, [#allocation6]
    $region9: #{tpu_custom_call.1} parent=1 // pred_fallthru
      _
    // Predicated region
    $region10: #{tpu_custom_call.1} parent=1 // pred_check
      _
    $region11: #{tpu_custom_call.1} parent=1 // pred_check_branch
      %36 = sbr.rel (0) target = $region13
    $region12: #{tpu_custom_call.1} parent=1 // pred_region
      _
    $region13: #{tpu_custom_call.1} parent=1 // pred_fallthru
      _
    // Predicated region
    $region14: #{tpu_custom_call.1} parent=1 // pred_check
      _
    $region15: #{tpu_custom_call.1} parent=1 // pred_check_branch
      %38 = sbr.rel (0) target = $region17
    $region16: #{tpu_custom_call.1} parent=1 // pred_region
      %40 = dma.done [#allocation3], 256
    $region17: #{tpu_custom_call.1} parent=1 // pred_fallthru
      _
    // Predicated region
    $region18: #{tpu_custom_call.1} parent=1 // pred_check
      _
    $region19: #{tpu_custom_call.1} parent=1 // pred_check_branch
      %42 = sbr.rel (0) target = $region21
    $region20: #{tpu_custom_call.1} parent=1 // pred_region
      %44 = dma.done [#allocation6], 16
    $region21: #{tpu_custom_call.1} parent=1 // pred_fallthru
      _
    %v45 = vld [vmem:[#allocation2] sm:$0xff]
    %v46 = vld [vmem:[#allocation2 + $0x8] sm:$0xff]
    %v47 = vld [vmem:[#allocation5] sm:$0x1]
    %v49 = vperm.slane %v47, 0
    %v51 = vmul.f32 %v45, %v49
    %v52 = vmul.f32 %v46, %v49
    %v53 = vld [vmem:[%s2] sm:$0x1]
    %v55 = vperm.slane %v53, 0
    %v57 = vadd.f32 %v51, %v55
    %v58 = vadd.f32 %v52, %v55
    %59 = vst [vmem:[#allocation7] sm:$0xff] %v57
    %60 = vst [vmem:[#allocation7 + $0x8] sm:$0xff] %v58
    // Predicated region
    $region22: #{tpu_custom_call.1} parent=1 // pred_check
      _
    $region23: #{tpu_custom_call.1} parent=1 // pred_check_branch
      %62 = sbr.rel (0) target = $region25
    $region24: #{tpu_custom_call.1} parent=1 // pred_region
      %64 = vsyncadd [#allocation4], 0
      %s65 = sshll.u32 [#allocation7], 4
      %s66 = int_to_ptr.vmem [resolvable:$true] %s65
      %s67 = sshll.u32 %s3, 4
      %s68 = int_to_ptr.hbm [resolvable:$true] %s67
      %73 = dma.vmem_to_hbm [thread:$0]  %s66, 256, %s68, [#allocation4], 128, 128, 8
    $region25: #{tpu_custom_call.1} parent=1 // pred_fallthru
      _
    // Predicated region
    $region26: #{tpu_custom_call.1} parent=1 // pred_check
      _
    $region27: #{tpu_custom_call.1} parent=1 // pred_check_branch
      %75 = sbr.rel (0) target = $region29
    $region28: #{tpu_custom_call.1} parent=1 // pred_region
      %77 = dma.done [#allocation4], 256
    $region29: #{tpu_custom_call.1} parent=1 // pred_fallthru
      _
    %78 = vsyncpa [#allocation3], 1
    %79 = vsyncpa [#allocation6], 1
    %80 = vsyncpa [#allocation4], 1

</llo_original>
